<compile_context>
chip_gen: v7x
topology: tpu7x:2x2x1
jax: 0.10.0
libtpu: 0.0.40
codegen_flags: <defaults>
</compile_context>

<pallas_src>
import functools

import jax
import jax.numpy as jnp
from jax.experimental import pallas as pl
from jax.experimental.pallas import tpu as pltpu


_LANE = 128
_TARGET_BLOCK_BYTES = 8 * 1024 * 1024   # per x block (review: 8-12 MiB on v6e/v7x)
_VMEM_LIMIT_BYTES = 48 * 1024 * 1024    # 3 buffers x 8 MiB + headroom; < v7x 64 MiB


# --------------------------------------------------------------------------- #
# Kernel bodies
# --------------------------------------------------------------------------- #

def _mlp_rows_store(sum_rows, max_rows, w1t_ref, w2t_ref, o_ref, inv_hw):
    """Lane-dense finalize.  sum_rows/max_rows: (Bt, C) f32, channel on lanes.

    Weights come in pre-transposed (w1t: (C, hid), w2t: (hid, C)) so the tiny
    MLP runs entirely in the lane-dense row layout and the (1, Bt, C) store
    needs no relayout (no column slices / lane-2 concatenates).
    """
    w1t = w1t_ref[...].astype(jnp.float32)
    w2t = w2t_ref[...].astype(jnp.float32)

    def mlp(rows):  # (Bt, C) -> (Bt, C)
        h = jnp.maximum(
            jnp.dot(rows, w1t, preferred_element_type=jnp.float32), 0.0)
        return jnp.dot(h, w2t, preferred_element_type=jnp.float32)

    out = jax.nn.sigmoid(mlp(sum_rows * inv_hw) + mlp(max_rows))   # (Bt, C)
    o_ref[...] = out[None].astype(o_ref.dtype)                     # (1, Bt, C)


def _ca_fused_kernel(x_ref, w1t_ref, w2t_ref, o_ref, *, inv_hw):
    """Whole image(s) per step: block (Bt, C, HW)."""
    x = x_ref[...]                                    # (Bt, C, HW), native dtype
    s = jnp.sum(x.astype(jnp.float32), axis=2)        # (Bt, C)  f32 accumulation
    # max in the native dtype (bf16 VPU on v6e/v7x); upcast only the tiny result
    m = jnp.max(x, axis=2).astype(jnp.float32)        # (Bt, C)
    _mlp_rows_store(s, m, w1t_ref, w2t_ref, o_ref, inv_hw)


def _ca_tiled_kernel(x_ref, w1t_ref, w2t_ref, o_ref, sum_acc, max_acc,
                     *, hw, block_hw, nk):
    """H*W tiled as the trailing 'arbitrary' axis: block (1, C, block_hw)."""
    k = pl.program_id(1)

    @pl.when(k == 0)
    def _init():
        sum_acc[...] = jnp.zeros_like(sum_acc)
        max_acc[...] = jnp.full_like(max_acc, -jnp.inf)

    def accum_chunk(off):
        c = x_ref[:, :, pl.ds(off, _LANE)].astype(jnp.float32)     # (1, C, 128)
        sum_acc[...] += c
        max_acc[...] = jnp.maximum(max_acc[...], c)

    def accum_block(n_chunks):
        # Steady state: lane-aligned 128-wide chunks accumulated into the
        # lane-wide scratch -- pure VPU adds/maxes, no masking, no XLU reduce.
        if n_chunks:
            @pl.loop(0, n_chunks)
            def _(i):
                accum_chunk(pl.multiple_of(i * _LANE, _LANE))

    n_chunks = block_hw // _LANE
    rem = hw - (nk - 1) * block_hw          # valid elements in the last block
    ragged = rem != block_hw

    if not ragged:
        accum_block(n_chunks)
    else:
        @pl.when(k < nk - 1)
        def _steady():
            accum_block(n_chunks)

        @pl.when(k == nk - 1)
        def _last():
            n_full = rem // _LANE
            tail = rem - n_full * _LANE
            accum_block(n_full)
            if tail:
                # The only masked chunk in the whole kernel (0 for sum, -inf
                # for max neutralize the garbage lanes of the partial block).
                c = x_ref[:, :, pl.ds(n_full * _LANE, _LANE)].astype(jnp.float32)
                lane = jax.lax.broadcasted_iota(jnp.int32, c.shape, 2)
                ok = lane < tail
                sum_acc[...] += jnp.where(ok, c, 0.0)
                max_acc[...] = jnp.maximum(max_acc[...],
                                           jnp.where(ok, c, -jnp.inf))

    @pl.when(k == nk - 1)
    def _finalize():
        # Single cross-lane reduce per image, then the lane-dense MLP/store.
        s_rows = jnp.sum(sum_acc[...], axis=2)        # (1, C)
        m_rows = jnp.max(max_acc[...], axis=2)        # (1, C)
        _mlp_rows_store(s_rows, m_rows, w1t_ref, w2t_ref, o_ref, 1.0 / hw)


# --------------------------------------------------------------------------- #
# Wrapper
# --------------------------------------------------------------------------- #

def _x_spec(shape, index_map, nbuf):
    """x BlockSpec with an optional deeper pipeline (hides DMA issue latency)."""
    if nbuf is not None:
        buffered = getattr(pl, "Buffered", None)
        if buffered is not None:
            try:
                return pl.BlockSpec(shape, index_map, pipeline_mode=buffered(nbuf))
            except TypeError:
                pass
    return pl.BlockSpec(shape, index_map)


def _pick_batch_tile(batch, image_bytes, target_bytes):
    # Fuse several batch elements per grid step (amortizes the ~0.35us/step
    # overhead for small CBAM feature maps), but keep >= 2 batch tiles when
    # B >= 2 so both TensorCores of a v7x chip have work on the parallel axis.
    cap = max(1, target_bytes // max(image_bytes, 1))
    if batch >= 2:
        cap = min(cap, batch // 2)
    cap = max(1, min(cap, batch))
    for bt in range(int(cap), 0, -1):
        if batch % bt == 0:
            return bt
    return 1


def channel_attention(x, w1, w2, *, block_hw=None,
                      target_block_bytes=_TARGET_BLOCK_BYTES):
    """CBAM channel attention.

    x:  (B, C, H, W)
    w1: (C // 16, C)   first 1x1 conv weight (out, in)
    w2: (C, C // 16)   second 1x1 conv weight (out, in)
    returns (B, C, 1, 1) = sigmoid(MLP(avg_pool(x)) + MLP(max_pool(x))).
    """
    B, C, H, W = x.shape
    hid = w1.shape[0]
    HW = H * W
    itemsize = jnp.dtype(x.dtype).itemsize
    image_bytes = C * HW * itemsize

    x_flat = x.reshape(B, C, HW)
    # Pre-transpose the tiny 1x1-conv weights (host-side, negligible) so the
    # in-kernel MLP runs with the channel axis lane-dense.
    w1t = jnp.transpose(w1)     # (C, hid)
    w2t = jnp.transpose(w2)     # (hid, C)

    # Choose between the single-block ("fused") path and the HW-tiled path.
    if block_hw is not None:
        block_hw = max(_LANE, (int(block_hw) // _LANE) * _LANE)
        tiled = block_hw < HW
    elif image_bytes > target_block_bytes:
        block_hw = max(_LANE, (target_block_bytes // (C * itemsize)) // _LANE * _LANE)
        tiled = block_hw < HW
    else:
        tiled = False

    if tiled:
        nk = -(-HW // block_hw)
    else:
        bt = _pick_batch_tile(B, image_bytes, target_block_bytes)
        n_bt = B // bt

    def _call(use_extra_buffering):
        nbuf = 3 if use_extra_buffering else None
        if not tiled:
            return pl.pallas_call(
                functools.partial(_ca_fused_kernel, inv_hw=1.0 / HW),
                out_shape=jax.ShapeDtypeStruct((n_bt, bt, C), x.dtype),
                grid_spec=pltpu.PrefetchScalarGridSpec(
                    num_scalar_prefetch=0,
                    grid=(n_bt,),
                    in_specs=[
                        _x_spec((bt, C, HW), lambda b: (b, 0, 0), nbuf),
                        pl.BlockSpec((C, hid), lambda b: (0, 0)),
                        pl.BlockSpec((hid, C), lambda b: (0, 0)),
                    ],
                    out_specs=pl.BlockSpec((1, bt, C), lambda b: (b, 0, 0)),
                ),
                compiler_params=pltpu.CompilerParams(
                    dimension_semantics=("parallel",),
                    vmem_limit_bytes=_VMEM_LIMIT_BYTES),
            )(x_flat, w1t, w2t)

        return pl.pallas_call(
            functools.partial(_ca_tiled_kernel, hw=HW, block_hw=block_hw, nk=nk),
            out_shape=jax.ShapeDtypeStruct((B, 1, C), x.dtype),
            grid_spec=pltpu.PrefetchScalarGridSpec(
                num_scalar_prefetch=0,
                grid=(B, nk),
                in_specs=[
                    _x_spec((1, C, block_hw), lambda b, k: (b, 0, k), nbuf),
                    pl.BlockSpec((C, hid), lambda b, k: (0, 0)),
                    pl.BlockSpec((hid, C), lambda b, k: (0, 0)),
                ],
                out_specs=pl.BlockSpec((1, 1, C), lambda b, k: (b, 0, 0)),
                scratch_shapes=[
                    pltpu.VMEM((1, C, _LANE), jnp.float32),   # running sum
                    pltpu.VMEM((1, C, _LANE), jnp.float32),   # running max
                ],
            ),
            compiler_params=pltpu.CompilerParams(
                dimension_semantics=("parallel", "arbitrary"),
                vmem_limit_bytes=_VMEM_LIMIT_BYTES),
        )(x_flat, w1t, w2t)

    try:
        out = _call(True)      # with pl.Buffered(3) on the x stream
    except Exception:          # fall back to default double-buffering
        out = _call(False)

    return out.reshape(B, C, 1, 1)


# --------------------------------------------------------------------------- #
# Pure-JAX reference (matches the PyTorch forward)
# --------------------------------------------------------------------------- #

def channel_attention_ref(x, w1, w2):
    avg = jnp.mean(x, axis=(2, 3))                    # (B, C)
    mx = jnp.max(x, axis=(2, 3))                      # (B, C)

    def mlp(v):                                       # (B, C) -> (B, C)
        return jnp.maximum(v @ w1.T, 0.0) @ w2.T

    return jax.nn.sigmoid(mlp(avg) + mlp(mx))[..., None, None]


if __name__ == "__main__":
    key = jax.random.PRNGKey(0)

    def run_case(B, C, H, W, block_hw=None):
        hid = C // 16
        kcase = jax.random.fold_in(key, B * 100000 + C * 1000 + H * 10 + (block_hw or 0))
        k1, k2, k3 = jax.random.split(kcase, 3)
        x = jax.random.normal(k1, (B, C, H, W), dtype=jnp.float32)
        w1 = jax.random.normal(k2, (hid, C), dtype=jnp.float32) * 0.1
        w2 = jax.random.normal(k3, (C, hid), dtype=jnp.float32) * 0.1

        out = channel_attention(x, w1, w2, block_hw=block_hw)
        jax.block_until_ready(out)
        ref = channel_attention_ref(x, w1, w2)
        assert out.shape == (B, C, 1, 1)
        assert jnp.allclose(out, ref, atol=1e-4, rtol=1e-4), (
            f"mismatch vs reference: B={B} C={C} H={H} W={W} block_hw={block_hw}")

    # Fused path: batch-tiled single-block images (Bt=2 -> two parallel steps).
    run_case(4, 64, 20, 20)
    # Tiled path, ragged last block, masked tail only (nk=4, rem=16).
    run_case(4, 64, 20, 20, block_hw=128)
    # Tiled path, ragged last block with full + masked chunks (nk=2, rem=144).
    run_case(4, 64, 20, 20, block_hw=256)
    # Tiled path, exactly divisible blocks -> no masking anywhere (nk=2).
    run_case(2, 64, 16, 16, block_hw=128)

    print("KERNEL_OK")
</pallas_src>

<mosaic_0001>
module attributes {stable_mosaic.version = 11 : i64} {
  func.func @_ca_fused_kernel(%arg0: i32, %arg1: memref<2x64x400xf32, #tpu.memory_space<vmem>>, %arg2: memref<64x4xf32, #tpu.memory_space<vmem>>, %arg3: memref<4x64xf32, #tpu.memory_space<vmem>>, %arg4: memref<1x2x64xf32, #tpu.memory_space<vmem>>) attributes {dimension_semantics = [#tpu.dimension_semantics<parallel>], iteration_bounds = array<i64: 2>, scalar_prefetch = 0 : i64, scratch_operands = 0 : i64, tpu.core_type = #tpu.core_type<tc>, window_params = [{transform_indices = @transform_0, window_bounds = array<i64: 2, 64, 400>}, {pipeline_mode = #tpu.pipeline_mode<synchronous>, transform_indices = @transform_1, window_bounds = array<i64: 64, 4>}, {pipeline_mode = #tpu.pipeline_mode<synchronous>, transform_indices = @transform_2, window_bounds = array<i64: 4, 64>}, {transform_indices = @transform_3, window_bounds = array<i64: 1, 2, 64>}]} {
    %c0 = arith.constant 0 : index
    %c0_0 = arith.constant 0 : index
    %c0_1 = arith.constant 0 : index
    %0 = vector.load %arg1[%c0, %c0_0, %c0_1] : memref<2x64x400xf32, #tpu.memory_space<vmem>>, vector<2x64x400xf32>
    %cst = arith.constant dense<0.000000e+00> : vector<2x64xf32>
    %1 = vector.multi_reduction <add>, %0, %cst [2] : vector<2x64x400xf32> to vector<2x64xf32>
    %cst_2 = arith.constant dense<0xFF800000> : vector<2x64xf32>
    %2 = vector.multi_reduction <maximumf>, %0, %cst_2 [2] : vector<2x64x400xf32> to vector<2x64xf32>
    %c0_3 = arith.constant 0 : index
    %c0_4 = arith.constant 0 : index
    %3 = vector.load %arg2[%c0_3, %c0_4] : memref<64x4xf32, #tpu.memory_space<vmem>>, vector<64x4xf32>
    %c0_5 = arith.constant 0 : index
    %c0_6 = arith.constant 0 : index
    %4 = vector.load %arg3[%c0_5, %c0_6] : memref<4x64xf32, #tpu.memory_space<vmem>>, vector<4x64xf32>
    %cst_7 = arith.constant 2.500000e-03 : f32
    %5 = vector.broadcast %cst_7 : f32 to vector<2x64xf32>
    %6 = arith.mulf %1, %5 : vector<2x64xf32>
    %cst_8 = arith.constant dense<0.000000e+00> : vector<2x4xf32>
    %7 = tpu.matmul %6, %3, %cst_8 {dimension_numbers = #tpu.dot_dimension_numbers<[1], [0], [0], [1], [0, 0, 1, 1], [], []>} : vector<2x64xf32>, vector<64x4xf32>, vector<2x4xf32> -> vector<2x4xf32>
    %cst_9 = arith.constant 0.000000e+00 : f32
    %8 = vector.broadcast %cst_9 : f32 to vector<2x4xf32>
    %9 = arith.maximumf %7, %8 : vector<2x4xf32>
    %cst_10 = arith.constant dense<0.000000e+00> : vector<2x64xf32>
    %10 = tpu.matmul %9, %4, %cst_10 {dimension_numbers = #tpu.dot_dimension_numbers<[1], [0], [0], [1], [0, 0, 1, 1], [], []>} : vector<2x4xf32>, vector<4x64xf32>, vector<2x64xf32> -> vector<2x64xf32>
    %cst_11 = arith.constant dense<0.000000e+00> : vector<2x4xf32>
    %11 = tpu.matmul %2, %3, %cst_11 {dimension_numbers = #tpu.dot_dimension_numbers<[1], [0], [0], [1], [0, 0, 1, 1], [], []>} : vector<2x64xf32>, vector<64x4xf32>, vector<2x4xf32> -> vector<2x4xf32>
    %cst_12 = arith.constant 0.000000e+00 : f32
    %12 = vector.broadcast %cst_12 : f32 to vector<2x4xf32>
    %13 = arith.maximumf %11, %12 : vector<2x4xf32>
    %cst_13 = arith.constant dense<0.000000e+00> : vector<2x64xf32>
    %14 = tpu.matmul %13, %4, %cst_13 {dimension_numbers = #tpu.dot_dimension_numbers<[1], [0], [0], [1], [0, 0, 1, 1], [], []>} : vector<2x4xf32>, vector<4x64xf32>, vector<2x64xf32> -> vector<2x64xf32>
    %15 = arith.addf %10, %14 : vector<2x64xf32>
    %16 = arith.negf %15 : vector<2x64xf32>
    %17 = math.exp %16 : vector<2x64xf32>
    %cst_14 = arith.constant 1.000000e+00 : f32
    %18 = vector.broadcast %cst_14 : f32 to vector<2x64xf32>
    %19 = arith.addf %18, %17 : vector<2x64xf32>
    %20 = arith.divf %18, %19 : vector<2x64xf32>
    %21 = vector.shape_cast %20 : vector<2x64xf32> to vector<1x2x64xf32>
    %c0_15 = arith.constant 0 : index
    %c0_16 = arith.constant 0 : index
    %c0_17 = arith.constant 0 : index
    %22 = vector.load %arg4[%c0_15, %c0_16, %c0_17] : memref<1x2x64xf32, #tpu.memory_space<vmem>>, vector<1x2x64xf32>
    tpu.vector_store %arg4[%c0_15, %c0_16, %c0_17], %21 {strides = array<i32>} : memref<1x2x64xf32, #tpu.memory_space<vmem>>, vector<1x2x64xf32>,
    return
  }
  func.func @transform_0(%arg0: i32) -> (i32, i32, i32) {
    %c0_i32 = arith.constant 0 : i32
    %c0_i32_0 = arith.constant 0 : i32
    %c0_i32_1 = arith.constant 0 : i32
    return %arg0, %c0_i32, %c0_i32_0 : i32, i32, i32
  }
  func.func @transform_1(%arg0: i32) -> (i32, i32) {
    %c0_i32 = arith.constant 0 : i32
    %c0_i32_0 = arith.constant 0 : i32
    %c0_i32_1 = arith.constant 0 : i32
    return %c0_i32, %c0_i32_0 : i32, i32
  }
  func.func @transform_2(%arg0: i32) -> (i32, i32) {
    %c0_i32 = arith.constant 0 : i32
    %c0_i32_0 = arith.constant 0 : i32
    %c0_i32_1 = arith.constant 0 : i32
    return %c0_i32, %c0_i32_0 : i32, i32
  }
  func.func @transform_3(%arg0: i32) -> (i32, i32, i32) {
    %c0_i32 = arith.constant 0 : i32
    %c0_i32_0 = arith.constant 0 : i32
    %c0_i32_1 = arith.constant 0 : i32
    return %arg0, %c0_i32, %c0_i32_0 : i32, i32, i32
  }
}

</mosaic_0001>

<llo_original>
// kernel: tpu_custom_call.1
$region0: #{tpu_custom_call.1}
  #allocation0 [shape = 'u32[]', space=smem, size = 0x4, offset = 0x4, fixed_abs, tag = 'smem constant byte address 0x4 - core index']
  #allocation1 [shape = 'u32[144,128]{1,0:T(1,128)}', space=vmem, size = 0x12000, scoped, tag = 'internal scratch']
  %s0 = inlined_call_operand.hbm [shape: f32[4,64,400], index: 0, kind: input, shape index: {}]
  %s1 = inlined_call_operand.vmem [shape: f32[64,4], index: 1, kind: input, shape index: {}]
  %s2 = inlined_call_operand.vmem [shape: f32[4,64], index: 2, kind: input, shape index: {}]
  %s3 = inlined_call_operand.hbm [shape: f32[2,2,64], index: 3, kind: output, shape index: {}]
  %s4 = sld [smem:[#allocation0]]
  $region49: #{tpu_custom_call.1} parent=0
    _
  %s6 = ssub.s32 1, %s4
  %s7 = scalar_select 0, %s6, %s4
  $region1: #{tpu_custom_call.1} parent=0
    #allocation2 [shape = 'u8[524288]{0}', space=vmem, size = 0x80000, scoped, tag = 'input window, operand 0']
    #allocation3 [shape = 's32[2]{0}', space=sflag, size = 0x8, scoped, tag = 'scoped memory for tpu_custom_call.1']
    #allocation4 [shape = 's32[2]{0}', space=sflag, size = 0x8, scoped, tag = 'scoped memory for tpu_custom_call.1']
    #allocation5 [shape = 'u8[2048]{0}', space=vmem, size = 0x800, scoped, tag = 'output window, operand 0']
    %8 = vsyncpa [#allocation3], 0
    %s9 = scalar_lea.sflag [#allocation3], 1
    %10 = vsyncpa %s9, 0
    %11 = vsyncpa [#allocation4], 0
    %s12 = scalar_lea.sflag [#allocation4], 1
    %13 = vsyncpa %s12, 0
    loop: start=0, step=1, limit=4
    $region2: #{tpu_custom_call.1} parent=1 // loop_pre_header
      _
    $region3: #{tpu_custom_call.1} parent=1 // loop_header
      %s15 = sphi 0, %s19
      %p16 = scmp.ge.s32.totalorder %s15, 4
      %s25 = sphi 0, %s27
      %s28 = sphi 0, %s25
      %s29 = sphi 0, %s28
      %s45 = sphi 0, %s29
      %s49 = sphi 0, %s49
      %s51 = sphi 0, %s49
      %s52 = sphi 0, %s51
      %s66 = sphi 0, %s52
      %s70 = sphi 0, %s70
      %s72 = sphi 0, %s70
      %s73 = sphi 0, %s72
      %s87 = sphi 0, %s73
      %s93 = sphi 0, %s95
      %s96 = sphi 0, %s93
      %s97 = sphi 0, %s96
      %s113 = sphi 0, %s97
    $region4: #{tpu_custom_call.1} parent=1 // loop_header_branch
      %18 = sbr.rel (%p16) target = $region8
    $region5: #{tpu_custom_call.1} parent=1 // loop_body
      %s20 = ssub.s32 %s15, 1
      %s21 = ssub.s32 %s15, 2
      %s22 = sadd.s32 %s15, 1
      %s23 = ssub.s32 %s15, %s22
      %p24 = scmp.eq.s32.totalorder %s23, 0
      %s26 = sadd.s32 %s25, 1
      %s27 = scalar_select %p24, %s25, %s26
      %p30 = pneg %p24
      %p31 = scmp.eq.s32.totalorder %s15, 1
      %p32 = por %p30, %p31
      %p33 = scmp.ne.s32.totalorder %s25, %s28
      %p34 = scmp.eq.s32.totalorder %s15, 0
      %p35 = por %p33, %p34
      %p36 = scmp.ne.s32.totalorder %s25, %s28
      %p37 = scmp.eq.s32.totalorder %s20, 1
      %p38 = por %p36, %p37
      %p39 = scmp.ne.s32.totalorder %s28, %s29
      %p40 = scmp.eq.s32.totalorder %s20, 0
      %p41 = por %p39, %p40
      %p42 = scmp.ne.s32.totalorder %s28, %s29
      %p43 = scmp.eq.s32.totalorder %s21, 1
      %p44 = por %p42, %p43
      %p46 = scmp.ne.s32.totalorder %s29, %s45
      %p47 = scmp.eq.s32.totalorder %s21, 0
      %p48 = por %p46, %p47
      %s50 = sadd.s32 %s49, 1
      %p53 = scmp.eq.s32.totalorder %s15, 1
      %p54 = scmp.ne.s32.totalorder %s49, %s51
      %p55 = scmp.eq.s32.totalorder %s15, 0
      %p56 = por %p54, %p55
      %p57 = scmp.ne.s32.totalorder %s49, %s51
      %p58 = scmp.eq.s32.totalorder %s20, 1
      %p59 = por %p57, %p58
      %p60 = scmp.ne.s32.totalorder %s51, %s52
      %p61 = scmp.eq.s32.totalorder %s20, 0
      %p62 = por %p60, %p61
      %p63 = scmp.ne.s32.totalorder %s51, %s52
      %p64 = scmp.eq.s32.totalorder %s21, 1
      %p65 = por %p63, %p64
      %p67 = scmp.ne.s32.totalorder %s52, %s66
      %p68 = scmp.eq.s32.totalorder %s21, 0
      %p69 = por %p67, %p68
      %s71 = sadd.s32 %s70, 1
      %p74 = scmp.eq.s32.totalorder %s15, 1
      %p75 = scmp.ne.s32.totalorder %s70, %s72
      %p76 = scmp.eq.s32.totalorder %s15, 0
      %p77 = por %p75, %p76
      %p78 = scmp.ne.s32.totalorder %s70, %s72
      %p79 = scmp.eq.s32.totalorder %s20, 1
      %p80 = por %p78, %p79
      %p81 = scmp.ne.s32.totalorder %s72, %s73
      %p82 = scmp.eq.s32.totalorder %s20, 0
      %p83 = por %p81, %p82
      %p84 = scmp.ne.s32.totalorder %s72, %s73
      %p85 = scmp.eq.s32.totalorder %s21, 1
      %p86 = por %p84, %p85
      %p88 = scmp.ne.s32.totalorder %s73, %s87
      %p89 = scmp.eq.s32.totalorder %s21, 0
      %p90 = por %p88, %p89
      %s91 = ssub.s32 %s15, %s22
      %p92 = scmp.eq.s32.totalorder %s91, 0
      %s94 = sadd.s32 %s93, 1
      %s95 = scalar_select %p92, %s93, %s94
      %p98 = pneg %p92
      %p99 = scmp.eq.s32.totalorder %s15, 1
      %p100 = por %p98, %p99
      %p101 = scmp.ne.s32.totalorder %s93, %s96
      %p102 = scmp.eq.s32.totalorder %s15, 0
      %p103 = por %p101, %p102
      %p104 = scmp.ne.s32.totalorder %s93, %s96
      %p105 = scmp.eq.s32.totalorder %s20, 1
      %p106 = por %p104, %p105
      %p107 = scmp.ne.s32.totalorder %s96, %s97
      %p108 = scmp.eq.s32.totalorder %s20, 0
      %p109 = por %p107, %p108
      %p110 = scmp.ne.s32.totalorder %s96, %s97
      %p111 = scmp.eq.s32.totalorder %s21, 1
      %p112 = por %p110, %p111
      %p114 = scmp.ne.s32.totalorder %s97, %s113
      %p115 = scmp.eq.s32.totalorder %s21, 0
      %p116 = por %p114, %p115
      %p117 = scmp.le.s32.totalorder 1, %s15
      %p118 = scmp.lt.s32.totalorder %s15, 3
      %p119 = pnand %p117, %p118
      %p120 = pneg %p119
      // Predicated region
      $region9: #{tpu_custom_call.1} parent=5 // pred_check
        _
      $region10: #{tpu_custom_call.1} parent=5 // pred_check_branch
        %122 = sbr.rel (%p119) target = $region12
      $region11: #{tpu_custom_call.1} parent=5 // pred_region
        %s123 = ssub.s32 %s15, 1
        // Predicated region
        $region13: #{tpu_custom_call.1} parent=11 // pred_check
          %p124 = pneg %p62
        $region14: #{tpu_custom_call.1} parent=11 // pred_check_branch
          %126 = sbr.rel (%p124) target = $region16
        $region15: #{tpu_custom_call.1} parent=11 // pred_region
          _
        $region16: #{tpu_custom_call.1} parent=11 // pred_fallthru
          _
        // Predicated region
        $region17: #{tpu_custom_call.1} parent=11 // pred_check
          %p127 = pneg %p83
        $region18: #{tpu_custom_call.1} parent=11 // pred_check_branch
          %129 = sbr.rel (%p127) target = $region20
        $region19: #{tpu_custom_call.1} parent=11 // pred_region
          _
        $region20: #{tpu_custom_call.1} parent=11 // pred_fallthru
          _
      $region12: #{tpu_custom_call.1} parent=5 // pred_fallthru
        _
      %p130 = scmp.lt.s32.totalorder %s15, 2
      // Predicated region
      $region21: #{tpu_custom_call.1} parent=5 // pred_check
        %p131 = pneg %p130
      $region22: #{tpu_custom_call.1} parent=5 // pred_check_branch
        %133 = sbr.rel (%p131) target = $region24
      $region23: #{tpu_custom_call.1} parent=5 // pred_region
        // Predicated region
        $region25: #{tpu_custom_call.1} parent=23 // pred_check
          %p134 = pneg %p35
        $region26: #{tpu_custom_call.1} parent=23 // pred_check_branch
          %136 = sbr.rel (%p134) target = $region28
        $region27: #{tpu_custom_call.1} parent=23 // pred_region
          %s137 = sand.u32 %s25, 1
          %s138 = scalar_lea.sflag [#allocation3], %s137
          %s139 = sand.u32 %s25, 1
          %s140 = smul.addr %s139, 512
          %s141 = scalar_lea.vmem [#allocation2], %s140
          %s142 = smul.u32 2, %s15
          %s144 = ssub.s32 8192, 8192
          %145 = vsyncadd %s138, %s144
          %s146 = smul.addr %s142, 32
          %s147 = smul.addr %s146, 128
          %s148 = scalar_lea.hbm %s0, %s147
          %s149 = sshll.u32 %s141, 4
          %s150 = int_to_ptr.vmem [resolvable:$true] %s149
          %155 = dma.hbm_to_vmem [thread:$0]  %s148, 8192, %s150, %s138, 512, 512, 32
        $region28: #{tpu_custom_call.1} parent=23 // pred_fallthru
          _
      $region24: #{tpu_custom_call.1} parent=5 // pred_fallthru
        _
      %p156 = scmp.le.s32.totalorder 1, %s15
      %p157 = scmp.lt.s32.totalorder %s15, 3
      %p158 = pnand %p156, %p157
      %p159 = pneg %p158
      // Predicated region
      $region29: #{tpu_custom_call.1} parent=5 // pred_check
        _
      $region30: #{tpu_custom_call.1} parent=5 // pred_check_branch
        %161 = sbr.rel (%p158) target = $region32
      $region31: #{tpu_custom_call.1} parent=5 // pred_region
        %s162 = ssub.s32 %s15, 1
        %s163 = sand.u32 %s28, 1
        %s164 = scalar_lea.sflag [#allocation3], %s163
        %s165 = sand.u32 %s28, 1
        %s166 = smul.addr %s165, 512
        %s167 = scalar_lea.vmem [#allocation2], %s166
        // Predicated region
        $region33: #{tpu_custom_call.1} parent=31 // pred_check
          %p168 = pneg %p41
        $region34: #{tpu_custom_call.1} parent=31 // pred_check_branch
          %170 = sbr.rel (%p168) target = $region36
        $region35: #{tpu_custom_call.1} parent=31 // pred_region
          %171 = dma.done %s164, 8192
        $region36: #{tpu_custom_call.1} parent=31 // pred_fallthru
          _
        %s172 = sand.u32 %s28, 1
        %s173 = scalar_lea.sflag [#allocation3], %s172
        %s174 = sand.u32 %s28, 1
        %s175 = smul.addr %s174, 512
        %s176 = scalar_lea.vmem [#allocation2], %s175
        %p177 = pneg %p41
        %p178 = pneg %p38
        %p179 = pneg %p62
        %p180 = pneg %p59
        %p181 = pneg %p83
        %p182 = pneg %p80
        %p183 = pneg %p109
        %p184 = pneg %p106
        %s185 = sand.u32 %s96, 1
        %s186 = scalar_lea.sflag [#allocation4], %s185
        %s187 = sand.u32 %s96, 1
        %s188 = smul.addr %s187, 2
        %s189 = scalar_lea.vmem [#allocation5], %s188
        %s190 = smul.u32 2, %s20
        %v191 = vld [vmem:[%s167] sm:$0xff]
        %v192 = vld [vmem:[%s167 + $0x8] sm:$0xff]
        %v193 = vld [vmem:[%s167 + $0x10] sm:$0xff]
        %v194 = vld [vmem:[%s167 + $0x18] sm:$0xff]
        %v195 = vld [vmem:[%s167 + $0x20] sm:$0xff]
        %v196 = vld [vmem:[%s167 + $0x28] sm:$0xff]
        %v197 = vld [vmem:[%s167 + $0x30] sm:$0xff]
        %v198 = vld [vmem:[%s167 + $0x38] sm:$0xff]
        %v199 = vld [vmem:[%s167 + $0x40] sm:$0xff]
        %v200 = vld [vmem:[%s167 + $0x48] sm:$0xff]
        %v201 = vld [vmem:[%s167 + $0x50] sm:$0xff]
        %v202 = vld [vmem:[%s167 + $0x58] sm:$0xff]
        %v203 = vld [vmem:[%s167 + $0x60] sm:$0xff]
        %v204 = vld [vmem:[%s167 + $0x68] sm:$0xff]
        %v205 = vld [vmem:[%s167 + $0x70] sm:$0xff]
        %v206 = vld [vmem:[%s167 + $0x78] sm:$0xff]
        %v207 = vld [vmem:[%s167 + $0x80] sm:$0xff]
        %v208 = vld [vmem:[%s167 + $0x88] sm:$0xff]
        %v209 = vld [vmem:[%s167 + $0x90] sm:$0xff]
        %v210 = vld [vmem:[%s167 + $0x98] sm:$0xff]
        %v211 = vld [vmem:[%s167 + $0xa0] sm:$0xff]
        %v212 = vld [vmem:[%s167 + $0xa8] sm:$0xff]
        %v213 = vld [vmem:[%s167 + $0xb0] sm:$0xff]
        %v214 = vld [vmem:[%s167 + $0xb8] sm:$0xff]
        %v215 = vld [vmem:[%s167 + $0xc0] sm:$0xff]
        %v216 = vld [vmem:[%s167 + $0xc8] sm:$0xff]
        %v217 = vld [vmem:[%s167 + $0xd0] sm:$0xff]
        %v218 = vld [vmem:[%s167 + $0xd8] sm:$0xff]
        %v219 = vld [vmem:[%s167 + $0xe0] sm:$0xff]
        %v220 = vld [vmem:[%s167 + $0xe8] sm:$0xff]
        %v221 = vld [vmem:[%s167 + $0xf0] sm:$0xff]
        %v222 = vld [vmem:[%s167 + $0xf8] sm:$0xff]
        %v223 = vld [vmem:[%s167 + $0x100] sm:$0xff]
        %v224 = vld [vmem:[%s167 + $0x108] sm:$0xff]
        %v225 = vld [vmem:[%s167 + $0x110] sm:$0xff]
        %v226 = vld [vmem:[%s167 + $0x118] sm:$0xff]
        %v227 = vld [vmem:[%s167 + $0x120] sm:$0xff]
        %v228 = vld [vmem:[%s167 + $0x128] sm:$0xff]
        %v229 = vld [vmem:[%s167 + $0x130] sm:$0xff]
        %v230 = vld [vmem:[%s167 + $0x138] sm:$0xff]
        %v231 = vld [vmem:[%s167 + $0x140] sm:$0xff]
        %v232 = vld [vmem:[%s167 + $0x148] sm:$0xff]
        %v233 = vld [vmem:[%s167 + $0x150] sm:$0xff]
        %v234 = vld [vmem:[%s167 + $0x158] sm:$0xff]
        %v235 = vld [vmem:[%s167 + $0x160] sm:$0xff]
        %v236 = vld [vmem:[%s167 + $0x168] sm:$0xff]
        %v237 = vld [vmem:[%s167 + $0x170] sm:$0xff]
        %v238 = vld [vmem:[%s167 + $0x178] sm:$0xff]
        %v239 = vld [vmem:[%s167 + $0x180] sm:$0xff]
        %v240 = vld [vmem:[%s167 + $0x188] sm:$0xff]
        %v241 = vld [vmem:[%s167 + $0x190] sm:$0xff]
        %v242 = vld [vmem:[%s167 + $0x198] sm:$0xff]
        %v243 = vld [vmem:[%s167 + $0x1a0] sm:$0xff]
        %v244 = vld [vmem:[%s167 + $0x1a8] sm:$0xff]
        %v245 = vld [vmem:[%s167 + $0x1b0] sm:$0xff]
        %v246 = vld [vmem:[%s167 + $0x1b8] sm:$0xff]
        %v247 = vld [vmem:[%s167 + $0x1c0] sm:$0xff]
        %v248 = vld [vmem:[%s167 + $0x1c8] sm:$0xff]
        %v249 = vld [vmem:[%s167 + $0x1d0] sm:$0xff]
        %v250 = vld [vmem:[%s167 + $0x1d8] sm:$0xff]
        %v251 = vld [vmem:[%s167 + $0x1e0] sm:$0xff]
        %v252 = vld [vmem:[%s167 + $0x1e8] sm:$0xff]
        %v253 = vld [vmem:[%s167 + $0x1f0] sm:$0xff]
        %v254 = vld [vmem:[%s167 + $0x1f8] sm:$0xff]
        %v255 = vadd.f32 %v191, %v192
        %v256 = vadd.f32 %v255, %v193
        %vm257 = vcmask 130048
        %v258 = vsel %vm257, %v194, 0.0
        %v259 = vadd.f32 %v256, %v258
        %260 = vadd.xlane.f32.xlu0 %v259
        %v261 = vpop.xlane.xlu0 %260
        %v262 = vadd.f32 %v195, %v196
        %v263 = vadd.f32 %v262, %v197
        %v264 = vsel %vm257, %v198, 0.0
        %v265 = vadd.f32 %v263, %v264
        %266 = vadd.xlane.f32.xlu0 %v265
        %v267 = vpop.xlane.xlu0 %266
        %v268 = vadd.f32 %v199, %v200
        %v269 = vadd.f32 %v268, %v201
        %v270 = vsel %vm257, %v202, 0.0
        %v271 = vadd.f32 %v269, %v270
        %272 = vadd.xlane.f32.xlu0 %v271
        %v273 = vpop.xlane.xlu0 %272
        %v274 = vadd.f32 %v203, %v204
        %v275 = vadd.f32 %v274, %v205
        %v276 = vsel %vm257, %v206, 0.0
        %v277 = vadd.f32 %v275, %v276
        %278 = vadd.xlane.f32.xlu0 %v277
        %v279 = vpop.xlane.xlu0 %278
        %v280 = vadd.f32 %v207, %v208
        %v281 = vadd.f32 %v280, %v209
        %v282 = vsel %vm257, %v210, 0.0
        %v283 = vadd.f32 %v281, %v282
        %284 = vadd.xlane.f32.xlu0 %v283
        %v285 = vpop.xlane.xlu0 %284
        %v286 = vadd.f32 %v211, %v212
        %v287 = vadd.f32 %v286, %v213
        %v288 = vsel %vm257, %v214, 0.0
        %v289 = vadd.f32 %v287, %v288
        %290 = vadd.xlane.f32.xlu0 %v289
        %v291 = vpop.xlane.xlu0 %290
        %v292 = vadd.f32 %v215, %v216
        %v293 = vadd.f32 %v292, %v217
        %v294 = vsel %vm257, %v218, 0.0
        %v295 = vadd.f32 %v293, %v294
        %296 = vadd.xlane.f32.xlu0 %v295
        %v297 = vpop.xlane.xlu0 %296
        %v298 = vadd.f32 %v219, %v220
        %v299 = vadd.f32 %v298, %v221
        %v300 = vsel %vm257, %v222, 0.0
        %v301 = vadd.f32 %v299, %v300
        %302 = vadd.xlane.f32.xlu0 %v301
        %v303 = vpop.xlane.xlu0 %302
        %v304 = vadd.f32 %v223, %v224
        %v305 = vadd.f32 %v304, %v225
        %v306 = vsel %vm257, %v226, 0.0
        %v307 = vadd.f32 %v305, %v306
        %308 = vadd.xlane.f32.xlu0 %v307
        %v309 = vpop.xlane.xlu0 %308
        %v310 = vadd.f32 %v227, %v228
        %v311 = vadd.f32 %v310, %v229
        %v312 = vsel %vm257, %v230, 0.0
        %v313 = vadd.f32 %v311, %v312
        %314 = vadd.xlane.f32.xlu0 %v313
        %v315 = vpop.xlane.xlu0 %314
        %v316 = vadd.f32 %v231, %v232
        %v317 = vadd.f32 %v316, %v233
        %v318 = vsel %vm257, %v234, 0.0
        %v319 = vadd.f32 %v317, %v318
        %320 = vadd.xlane.f32.xlu0 %v319
        %v321 = vpop.xlane.xlu0 %320
        %v322 = vadd.f32 %v235, %v236
        %v323 = vadd.f32 %v322, %v237
        %v324 = vsel %vm257, %v238, 0.0
        %v325 = vadd.f32 %v323, %v324
        %326 = vadd.xlane.f32.xlu0 %v325
        %v327 = vpop.xlane.xlu0 %326
        %v328 = vadd.f32 %v239, %v240
        %v329 = vadd.f32 %v328, %v241
        %v330 = vsel %vm257, %v242, 0.0
        %v331 = vadd.f32 %v329, %v330
        %332 = vadd.xlane.f32.xlu0 %v331
        %v333 = vpop.xlane.xlu0 %332
        %v334 = vadd.f32 %v243, %v244
        %v335 = vadd.f32 %v334, %v245
        %v336 = vsel %vm257, %v246, 0.0
        %v337 = vadd.f32 %v335, %v336
        %338 = vadd.xlane.f32.xlu0 %v337
        %v339 = vpop.xlane.xlu0 %338
        %v340 = vadd.f32 %v247, %v248
        %v341 = vadd.f32 %v340, %v249
        %v342 = vsel %vm257, %v250, 0.0
        %v343 = vadd.f32 %v341, %v342
        %344 = vadd.xlane.f32.xlu0 %v343
        %v345 = vpop.xlane.xlu0 %344
        %v346 = vadd.f32 %v251, %v252
        %v347 = vadd.f32 %v346, %v253
        %v348 = vsel %vm257, %v254, 0.0
        %v349 = vadd.f32 %v347, %v348
        %350 = vadd.xlane.f32.xlu0 %v349
        %v351 = vpop.xlane.xlu0 %350
        %v352 = vmax.f32 %v191, %v192
        %v353 = vmax.f32 %v352, %v193
        %v354 = vsel %vm257, %v194, -inf
        %v355 = vmax.f32 %v353, %v354
        %356 = vmax.xlane.f32.xlu0 %v355
        %v357 = vpop.xlane.xlu0 %356
        %v358 = vmax.f32 %v195, %v196
        %v359 = vmax.f32 %v358, %v197
        %v360 = vsel %vm257, %v198, -inf
        %v361 = vmax.f32 %v359, %v360
        %362 = vmax.xlane.f32.xlu0 %v361
        %v363 = vpop.xlane.xlu0 %362
        %v364 = vmax.f32 %v199, %v200
        %v365 = vmax.f32 %v364, %v201
        %v366 = vsel %vm257, %v202, -inf
        %v367 = vmax.f32 %v365, %v366
        %368 = vmax.xlane.f32.xlu0 %v367
        %v369 = vpop.xlane.xlu0 %368
        %v370 = vmax.f32 %v203, %v204
        %v371 = vmax.f32 %v370, %v205
        %v372 = vsel %vm257, %v206, -inf
        %v373 = vmax.f32 %v371, %v372
        %374 = vmax.xlane.f32.xlu0 %v373
        %v375 = vpop.xlane.xlu0 %374
        %v376 = vmax.f32 %v207, %v208
        %v377 = vmax.f32 %v376, %v209
        %v378 = vsel %vm257, %v210, -inf
        %v379 = vmax.f32 %v377, %v378
        %380 = vmax.xlane.f32.xlu0 %v379
        %v381 = vpop.xlane.xlu0 %380
        %v382 = vmax.f32 %v211, %v212
        %v383 = vmax.f32 %v382, %v213
        %v384 = vsel %vm257, %v214, -inf
        %v385 = vmax.f32 %v383, %v384
        %386 = vmax.xlane.f32.xlu0 %v385
        %v387 = vpop.xlane.xlu0 %386
        %v388 = vmax.f32 %v215, %v216
        %v389 = vmax.f32 %v388, %v217
        %v390 = vsel %vm257, %v218, -inf
        %v391 = vmax.f32 %v389, %v390
        %392 = vmax.xlane.f32.xlu0 %v391
        %v393 = vpop.xlane.xlu0 %392
        %v394 = vmax.f32 %v219, %v220
        %v395 = vmax.f32 %v394, %v221
        %v396 = vsel %vm257, %v222, -inf
        %v397 = vmax.f32 %v395, %v396
        %398 = vmax.xlane.f32.xlu0 %v397
        %v399 = vpop.xlane.xlu0 %398
        %v400 = vmax.f32 %v223, %v224
        %v401 = vmax.f32 %v400, %v225
        %v402 = vsel %vm257, %v226, -inf
        %v403 = vmax.f32 %v401, %v402
        %404 = vmax.xlane.f32.xlu0 %v403
        %v405 = vpop.xlane.xlu0 %404
        %v406 = vmax.f32 %v227, %v228
        %v407 = vmax.f32 %v406, %v229
        %v408 = vsel %vm257, %v230, -inf
        %v409 = vmax.f32 %v407, %v408
        %410 = vmax.xlane.f32.xlu0 %v409
        %v411 = vpop.xlane.xlu0 %410
        %v412 = vmax.f32 %v231, %v232
        %v413 = vmax.f32 %v412, %v233
        %v414 = vsel %vm257, %v234, -inf
        %v415 = vmax.f32 %v413, %v414
        %416 = vmax.xlane.f32.xlu0 %v415
        %v417 = vpop.xlane.xlu0 %416
        %v418 = vmax.f32 %v235, %v236
        %v419 = vmax.f32 %v418, %v237
        %v420 = vsel %vm257, %v238, -inf
        %v421 = vmax.f32 %v419, %v420
        %422 = vmax.xlane.f32.xlu0 %v421
        %v423 = vpop.xlane.xlu0 %422
        %v424 = vmax.f32 %v239, %v240
        %v425 = vmax.f32 %v424, %v241
        %v426 = vsel %vm257, %v242, -inf
        %v427 = vmax.f32 %v425, %v426
        %428 = vmax.xlane.f32.xlu0 %v427
        %v429 = vpop.xlane.xlu0 %428
        %v430 = vmax.f32 %v243, %v244
        %v431 = vmax.f32 %v430, %v245
        %v432 = vsel %vm257, %v246, -inf
        %v433 = vmax.f32 %v431, %v432
        %434 = vmax.xlane.f32.xlu0 %v433
        %v435 = vpop.xlane.xlu0 %434
        %v436 = vmax.f32 %v247, %v248
        %v437 = vmax.f32 %v436, %v249
        %v438 = vsel %vm257, %v250, -inf
        %v439 = vmax.f32 %v437, %v438
        %440 = vmax.xlane.f32.xlu0 %v439
        %v441 = vpop.xlane.xlu0 %440
        %v442 = vmax.f32 %v251, %v252
        %v443 = vmax.f32 %v442, %v253
        %v444 = vsel %vm257, %v254, -inf
        %v445 = vmax.f32 %v443, %v444
        %446 = vmax.xlane.f32.xlu0 %v445
        %v447 = vpop.xlane.xlu0 %446
        %v448 = vld [vmem:[%s1] sm:$0xff]
        %v449 = vld [vmem:[%s1 + $0x8] sm:$0xff]
        %v450 = vld [vmem:[%s1 + $0x10] sm:$0xff]
        %v451 = vld [vmem:[%s1 + $0x18] sm:$0xff]
        %v452 = vld [vmem:[%s1 + $0x20] sm:$0xff]
        %v453 = vld [vmem:[%s1 + $0x28] sm:$0xff]
        %v454 = vld [vmem:[%s1 + $0x30] sm:$0xff]
        %v455 = vld [vmem:[%s1 + $0x38] sm:$0xff]
        %v456 = vld [vmem:[%s2] sm:$0xf]
        %v457 = vmul.f32 %v261, 0.0025
        %v458 = vmul.f32 %v267, 0.0025
        %v459 = vmul.f32 %v273, 0.0025
        %v460 = vmul.f32 %v279, 0.0025
        %v461 = vmul.f32 %v285, 0.0025
        %v462 = vmul.f32 %v291, 0.0025
        %v463 = vmul.f32 %v297, 0.0025
        %v464 = vmul.f32 %v303, 0.0025
        %v465 = vmul.f32 %v309, 0.0025
        %v466 = vmul.f32 %v315, 0.0025
        %v467 = vmul.f32 %v321, 0.0025
        %v468 = vmul.f32 %v327, 0.0025
        %v469 = vmul.f32 %v333, 0.0025
        %v470 = vmul.f32 %v339, 0.0025
        %v471 = vmul.f32 %v345, 0.0025
        %v472 = vmul.f32 %v351, 0.0025
        %v489 = vlaneseq
        %v490 = vand.u32 %v489, 127
        %v491 = vlaneseq
        %v492 = vshrl.u32 %v491, 7
        %v493 = vsub.s32 %v490, %v492
        %v494 = vrot.slane %v457, %v493
        %v495 = vadd.s32 %v490, 4294967288
        %v496 = vlaneseq
        %v497 = vshrl.u32 %v496, 7
        %v498 = vsub.s32 %v495, %v497
        %v499 = vrot.slane %v458, %v498
        %vm500 = vcmask 130112
        %v501 = vsel %vm500, %v499, %v494
        %v502 = vadd.s32 %v490, 4294967280
        %v503 = vlaneseq
        %v504 = vshrl.u32 %v503, 7
        %v505 = vsub.s32 %v502, %v504
        %v506 = vrot.slane %v459, %v505
        %vm507 = vcmask 195712
        %v508 = vsel %vm507, %v506, %v501
        %v509 = vadd.s32 %v490, 4294967272
        %v510 = vlaneseq
        %v511 = vshrl.u32 %v510, 7
        %v512 = vsub.s32 %v509, %v511
        %v513 = vrot.slane %v460, %v512
        %vm514 = vcmask 261312
        %v515 = vsel %vm514, %v513, %v508
        %v516 = vadd.s32 %v490, 4294967264
        %v517 = vlaneseq
        %v518 = vshrl.u32 %v517, 7
        %v519 = vsub.s32 %v516, %v518
        %v520 = vrot.slane %v461, %v519
        %vm521 = vcmask 326912
        %v522 = vsel %vm521, %v520, %v515
        %v523 = vadd.s32 %v490, 4294967256
        %v524 = vlaneseq
        %v525 = vshrl.u32 %v524, 7
        %v526 = vsub.s32 %v523, %v525
        %v527 = vrot.slane %v462, %v526
        %vm528 = vcmask 392512
        %v529 = vsel %vm528, %v527, %v522
        %v530 = vadd.s32 %v490, 4294967248
        %v531 = vlaneseq
        %v532 = vshrl.u32 %v531, 7
        %v533 = vsub.s32 %v530, %v532
        %v534 = vrot.slane %v463, %v533
        %vm535 = vcmask 458112
        %v536 = vsel %vm535, %v534, %v529
        %v537 = vadd.s32 %v490, 4294967240
        %v538 = vlaneseq
        %v539 = vshrl.u32 %v538, 7
        %v540 = vsub.s32 %v537, %v539
        %v541 = vrot.slane %v464, %v540
        %vm542 = vcmask 523712
        %v543 = vsel %vm542, %v541, %v536
        %v544 = vlaneseq
        %v545 = vshrl.u32 %v544, 7
        %v546 = vsub.s32 %v490, %v545
        %v547 = vrot.slane %v465, %v546
        %v548 = vlaneseq
        %v549 = vshrl.u32 %v548, 7
        %v550 = vsub.s32 %v495, %v549
        %v551 = vrot.slane %v466, %v550
        %v552 = vsel %vm500, %v551, %v547
        %v553 = vlaneseq
        %v554 = vshrl.u32 %v553, 7
        %v555 = vsub.s32 %v502, %v554
        %v556 = vrot.slane %v467, %v555
        %v557 = vsel %vm507, %v556, %v552
        %v558 = vlaneseq
        %v559 = vshrl.u32 %v558, 7
        %v560 = vsub.s32 %v509, %v559
        %v561 = vrot.slane %v468, %v560
        %v562 = vsel %vm514, %v561, %v557
        %v563 = vlaneseq
        %v564 = vshrl.u32 %v563, 7
        %v565 = vsub.s32 %v516, %v564
        %v566 = vrot.slane %v469, %v565
        %v567 = vsel %vm521, %v566, %v562
        %v568 = vlaneseq
        %v569 = vshrl.u32 %v568, 7
        %v570 = vsub.s32 %v523, %v569
        %v571 = vrot.slane %v470, %v570
        %v572 = vsel %vm528, %v571, %v567
        %v573 = vlaneseq
        %v574 = vshrl.u32 %v573, 7
        %v575 = vsub.s32 %v530, %v574
        %v576 = vrot.slane %v471, %v575
        %v577 = vsel %vm535, %v576, %v572
        %v578 = vlaneseq
        %v579 = vshrl.u32 %v578, 7
        %v580 = vsub.s32 %v537, %v579
        %v581 = vrot.slane %v472, %v580
        %v582 = vsel %vm542, %v581, %v577
        %vm583 = vcmask 1041409
        %v584 = vsel %vm583, %v582, %v543
        %vm585 = vcmask 523264
        %v586 = vsel %vm585, %v584, 0
        %588 = vmatprep.subr.mxu0 0.0
        %589 = vmatpush1.msra.mxu0 %v448
        %590 = vmatprep.subr.mxu0 0.0
        %591 = vmatpush1.msra.mxu0 %v449
        %592 = vmatprep.subr.mxu0 0.0
        %593 = vmatpush1.msra.mxu0 %v450
        %594 = vmatprep.subr.mxu0 0.0
        %595 = vmatpush1.msra.mxu0 %v451
        %596 = vmatprep.subr.mxu0 0.0
        %597 = vmatpush1.msra.mxu0 %v452
        %598 = vmatprep.subr.mxu0 0.0
        %599 = vmatpush1.msra.mxu0 %v453
        %600 = vmatprep.subr.mxu0 0.0
        %601 = vmatpush1.msra.mxu0 %v454
        %602 = vmatprep.subr.mxu0 0.0
        %603 = vmatpush1.msra.mxu0 %v455
        %604 = vmatprep.subr.mxu0 0.0
        %605 = vmatpush1.msra.mxu0 0.0
        %606 = vmatprep.subr.mxu0 0.0
        %607 = vmatpush1.msra.mxu0 0.0
        %608 = vmatprep.subr.mxu0 0.0
        %609 = vmatpush1.msra.mxu0 0.0
        %610 = vmatprep.subr.mxu0 0.0
        %611 = vmatpush1.msra.mxu0 0.0
        %612 = vmatprep.subr.mxu0 0.0
        %613 = vmatpush1.msra.mxu0 0.0
        %614 = vmatprep.subr.mxu0 0.0
        %615 = vmatpush1.msra.mxu0 0.0
        %616 = vmatprep.subr.mxu0 0.0
        %617 = vmatpush1.msra.mxu0 0.0
        %618 = vmatprep.subr.mxu0 0.0
        %619 = vmatpush1.msra.mxu0 0.0
        %620 = vmatprep.subr.mxu0 0.0
        %621 = vmatpush1.msra.mxu0 0.0
        %622 = vmatprep.subr.mxu0 0.0
        %623 = vmatpush1.msra.mxu0 0.0
        %624 = vmatprep.subr.mxu0 0.0
        %625 = vmatpush1.msra.mxu0 0.0
        %626 = vmatprep.subr.mxu0 0.0
        %627 = vmatpush1.msra.mxu0 0.0
        %628 = vmatprep.subr.mxu0 0.0
        %629 = vmatpush1.msra.mxu0 0.0
        %630 = vmatprep.subr.mxu0 0.0
        %631 = vmatpush1.msra.mxu0 0.0
        %632 = vmatprep.subr.mxu0 0.0
        %633 = vmatpush1.msra.mxu0 0.0
        %634 = vmatprep.subr.mxu0 0.0
        %635 = vmatpush1.msra.mxu0 0.0
        %636 = vmatprep.subr.mxu0 0.0
        %637 = vmatpush1.msra.mxu0 0.0
        %638 = vmatprep.subr.mxu0 0.0
        %639 = vmatpush1.msra.mxu0 0.0
        %640 = vmatprep.subr.mxu0 0.0
        %641 = vmatpush1.msra.mxu0 0.0
        %642 = vmatprep.subr.mxu0 0.0
        %643 = vmatpush1.msra.mxu0 0.0
        %644 = vmatprep.subr.mxu0 0.0
        %645 = vmatpush1.msra.mxu0 0.0
        %646 = vmatprep.subr.mxu0 0.0
        %647 = vmatpush1.msra.mxu0 0.0
        %648 = vmatprep.subr.mxu0 0.0
        %649 = vmatpush1.msra.mxu0 0.0
        %650 = vmatprep.subr.mxu0 0.0
        %651 = vmatpush1.msra.mxu0 0.0
        %652 = vmatprep.mubr.f32.mxu0 0.0
        %653 = vmatmul.mubr.f32.gmra.mrb[0].mxu0 %v586
        %v654 = vpop.f32.mrb[0].mxu0
        %v655 = vadd.f32 0.0, %v654
        %v656 = vpop.f32.mrb[0].mxu0
        %657 = vdwg.mxu0
        %v658 = vmax.f32 %v655, 0.0
        %v675 = vlaneseq
        %v676 = vshrl.u32 %v675, 7
        %v677 = vsub.s32 %v490, %v676
        %v678 = vrot.slane %v357, %v677
        %v679 = vlaneseq
        %v680 = vshrl.u32 %v679, 7
        %v681 = vsub.s32 %v495, %v680
        %v682 = vrot.slane %v363, %v681
        %v683 = vsel %vm500, %v682, %v678
        %v684 = vlaneseq
        %v685 = vshrl.u32 %v684, 7
        %v686 = vsub.s32 %v502, %v685
        %v687 = vrot.slane %v369, %v686
        %v688 = vsel %vm507, %v687, %v683
        %v689 = vlaneseq
        %v690 = vshrl.u32 %v689, 7
        %v691 = vsub.s32 %v509, %v690
        %v692 = vrot.slane %v375, %v691
        %v693 = vsel %vm514, %v692, %v688
        %v694 = vlaneseq
        %v695 = vshrl.u32 %v694, 7
        %v696 = vsub.s32 %v516, %v695
        %v697 = vrot.slane %v381, %v696
        %v698 = vsel %vm521, %v697, %v693
        %v699 = vlaneseq
        %v700 = vshrl.u32 %v699, 7
        %v701 = vsub.s32 %v523, %v700
        %v702 = vrot.slane %v387, %v701
        %v703 = vsel %vm528, %v702, %v698
        %v704 = vlaneseq
        %v705 = vshrl.u32 %v704, 7
        %v706 = vsub.s32 %v530, %v705
        %v707 = vrot.slane %v393, %v706
        %v708 = vsel %vm535, %v707, %v703
        %v709 = vlaneseq
        %v710 = vshrl.u32 %v709, 7
        %v711 = vsub.s32 %v537, %v710
        %v712 = vrot.slane %v399, %v711
        %v713 = vsel %vm542, %v712, %v708
        %v714 = vlaneseq
        %v715 = vshrl.u32 %v714, 7
        %v716 = vsub.s32 %v490, %v715
        %v717 = vrot.slane %v405, %v716
        %v718 = vlaneseq
        %v719 = vshrl.u32 %v718, 7
        %v720 = vsub.s32 %v495, %v719
        %v721 = vrot.slane %v411, %v720
        %v722 = vsel %vm500, %v721, %v717
        %v723 = vlaneseq
        %v724 = vshrl.u32 %v723, 7
        %v725 = vsub.s32 %v502, %v724
        %v726 = vrot.slane %v417, %v725
        %v727 = vsel %vm507, %v726, %v722
        %v728 = vlaneseq
        %v729 = vshrl.u32 %v728, 7
        %v730 = vsub.s32 %v509, %v729
        %v731 = vrot.slane %v423, %v730
        %v732 = vsel %vm514, %v731, %v727
        %v733 = vlaneseq
        %v734 = vshrl.u32 %v733, 7
        %v735 = vsub.s32 %v516, %v734
        %v736 = vrot.slane %v429, %v735
        %v737 = vsel %vm521, %v736, %v732
        %v738 = vlaneseq
        %v739 = vshrl.u32 %v738, 7
        %v740 = vsub.s32 %v523, %v739
        %v741 = vrot.slane %v435, %v740
        %v742 = vsel %vm528, %v741, %v737
        %v743 = vlaneseq
        %v744 = vshrl.u32 %v743, 7
        %v745 = vsub.s32 %v530, %v744
        %v746 = vrot.slane %v441, %v745
        %v747 = vsel %vm535, %v746, %v742
        %v748 = vlaneseq
        %v749 = vshrl.u32 %v748, 7
        %v750 = vsub.s32 %v537, %v749
        %v751 = vrot.slane %v447, %v750
        %v752 = vsel %vm542, %v751, %v747
        %v753 = vsel %vm583, %v752, %v713
        %v754 = vsel %vm585, %v753, 0
        %756 = vmatprep.subr.mxu0 0.0
        %757 = vmatpush1.msra.mxu0 %v448
        %758 = vmatprep.subr.mxu0 0.0
        %759 = vmatpush1.msra.mxu0 %v449
        %760 = vmatprep.subr.mxu0 0.0
        %761 = vmatpush1.msra.mxu0 %v450
        %762 = vmatprep.subr.mxu0 0.0
        %763 = vmatpush1.msra.mxu0 %v451
        %764 = vmatprep.subr.mxu0 0.0
        %765 = vmatpush1.msra.mxu0 %v452
        %766 = vmatprep.subr.mxu0 0.0
        %767 = vmatpush1.msra.mxu0 %v453
        %768 = vmatprep.subr.mxu0 0.0
        %769 = vmatpush1.msra.mxu0 %v454
        %770 = vmatprep.subr.mxu0 0.0
        %771 = vmatpush1.msra.mxu0 %v455
        %772 = vmatprep.subr.mxu0 0.0
        %773 = vmatpush1.msra.mxu0 0.0
        %774 = vmatprep.subr.mxu0 0.0
        %775 = vmatpush1.msra.mxu0 0.0
        %776 = vmatprep.subr.mxu0 0.0
        %777 = vmatpush1.msra.mxu0 0.0
        %778 = vmatprep.subr.mxu0 0.0
        %779 = vmatpush1.msra.mxu0 0.0
        %780 = vmatprep.subr.mxu0 0.0
        %781 = vmatpush1.msra.mxu0 0.0
        %782 = vmatprep.subr.mxu0 0.0
        %783 = vmatpush1.msra.mxu0 0.0
        %784 = vmatprep.subr.mxu0 0.0
        %785 = vmatpush1.msra.mxu0 0.0
        %786 = vmatprep.subr.mxu0 0.0
        %787 = vmatpush1.msra.mxu0 0.0
        %788 = vmatprep.subr.mxu0 0.0
        %789 = vmatpush1.msra.mxu0 0.0
        %790 = vmatprep.subr.mxu0 0.0
        %791 = vmatpush1.msra.mxu0 0.0
        %792 = vmatprep.subr.mxu0 0.0
        %793 = vmatpush1.msra.mxu0 0.0
        %794 = vmatprep.subr.mxu0 0.0
        %795 = vmatpush1.msra.mxu0 0.0
        %796 = vmatprep.subr.mxu0 0.0
        %797 = vmatpush1.msra.mxu0 0.0
        %798 = vmatprep.subr.mxu0 0.0
        %799 = vmatpush1.msra.mxu0 0.0
        %800 = vmatprep.subr.mxu0 0.0
        %801 = vmatpush1.msra.mxu0 0.0
        %802 = vmatprep.subr.mxu0 0.0
        %803 = vmatpush1.msra.mxu0 0.0
        %804 = vmatprep.subr.mxu0 0.0
        %805 = vmatpush1.msra.mxu0 0.0
        %806 = vmatprep.subr.mxu0 0.0
        %807 = vmatpush1.msra.mxu0 0.0
        %808 = vmatprep.subr.mxu0 0.0
        %809 = vmatpush1.msra.mxu0 0.0
        %810 = vmatprep.subr.mxu0 0.0
        %811 = vmatpush1.msra.mxu0 0.0
        %812 = vmatprep.subr.mxu0 0.0
        %813 = vmatpush1.msra.mxu0 0.0
        %814 = vmatprep.subr.mxu0 0.0
        %815 = vmatpush1.msra.mxu0 0.0
        %816 = vmatprep.subr.mxu0 0.0
        %817 = vmatpush1.msra.mxu0 0.0
        %818 = vmatprep.subr.mxu0 0.0
        %819 = vmatpush1.msra.mxu0 0.0
        %820 = vmatprep.mubr.f32.mxu0 0.0
        %821 = vmatmul.mubr.f32.gmra.mrb[0].mxu0 %v754
        %v822 = vpop.f32.mrb[0].mxu0
        %v823 = vadd.f32 0.0, %v822
        %v824 = vpop.f32.mrb[0].mxu0
        %825 = vdwg.mxu0
        %v826 = vmax.f32 %v823, 0.0
        %vm827 = vcmask 31744
        %v829 = vsel %vm827, %v826, 0
        %vm831 = vcmask 1043456
        %v833 = vsel %vm831, %v456, 0
        %835 = vmatprep.subr.mxu0 0.0
        %836 = vmatpush1.msra.mxu0 %v833
        %837 = vmatprep.subr.mxu0 0.0
        %838 = vmatpush1.msra.mxu0 0.0
        %839 = vmatprep.subr.mxu0 0.0
        %840 = vmatpush1.msra.mxu0 0.0
        %841 = vmatprep.subr.mxu0 0.0
        %842 = vmatpush1.msra.mxu0 0.0
        %843 = vmatprep.subr.mxu0 0.0
        %844 = vmatpush1.msra.mxu0 0.0
        %845 = vmatprep.subr.mxu0 0.0
        %846 = vmatpush1.msra.mxu0 0.0
        %847 = vmatprep.subr.mxu0 0.0
        %848 = vmatpush1.msra.mxu0 0.0
        %849 = vmatprep.subr.mxu0 0.0
        %850 = vmatpush1.msra.mxu0 0.0
        %851 = vmatprep.subr.mxu0 0.0
        %852 = vmatpush1.msra.mxu0 0.0
        %853 = vmatprep.subr.mxu0 0.0
        %854 = vmatpush1.msra.mxu0 0.0
        %855 = vmatprep.subr.mxu0 0.0
        %856 = vmatpush1.msra.mxu0 0.0
        %857 = vmatprep.subr.mxu0 0.0
        %858 = vmatpush1.msra.mxu0 0.0
        %859 = vmatprep.subr.mxu0 0.0
        %860 = vmatpush1.msra.mxu0 0.0
        %861 = vmatprep.subr.mxu0 0.0
        %862 = vmatpush1.msra.mxu0 0.0
        %863 = vmatprep.subr.mxu0 0.0
        %864 = vmatpush1.msra.mxu0 0.0
        %865 = vmatprep.subr.mxu0 0.0
        %866 = vmatpush1.msra.mxu0 0.0
        %867 = vmatprep.subr.mxu0 0.0
        %868 = vmatpush1.msra.mxu0 0.0
        %869 = vmatprep.subr.mxu0 0.0
        %870 = vmatpush1.msra.mxu0 0.0
        %871 = vmatprep.subr.mxu0 0.0
        %872 = vmatpush1.msra.mxu0 0.0
        %873 = vmatprep.subr.mxu0 0.0
        %874 = vmatpush1.msra.mxu0 0.0
        %875 = vmatprep.subr.mxu0 0.0
        %876 = vmatpush1.msra.mxu0 0.0
        %877 = vmatprep.subr.mxu0 0.0
        %878 = vmatpush1.msra.mxu0 0.0
        %879 = vmatprep.subr.mxu0 0.0
        %880 = vmatpush1.msra.mxu0 0.0
        %881 = vmatprep.subr.mxu0 0.0
        %882 = vmatpush1.msra.mxu0 0.0
        %883 = vmatprep.subr.mxu0 0.0
        %884 = vmatpush1.msra.mxu0 0.0
        %885 = vmatprep.subr.mxu0 0.0
        %886 = vmatpush1.msra.mxu0 0.0
        %887 = vmatprep.subr.mxu0 0.0
        %888 = vmatpush1.msra.mxu0 0.0
        %889 = vmatprep.subr.mxu0 0.0
        %890 = vmatpush1.msra.mxu0 0.0
        %891 = vmatprep.subr.mxu0 0.0
        %892 = vmatpush1.msra.mxu0 0.0
        %893 = vmatprep.subr.mxu0 0.0
        %894 = vmatpush1.msra.mxu0 0.0
        %895 = vmatprep.subr.mxu0 0.0
        %896 = vmatpush1.msra.mxu0 0.0
        %897 = vmatprep.subr.mxu0 0.0
        %898 = vmatpush1.msra.mxu0 0.0
        %899 = vmatprep.mubr.f32.mxu0 0.0
        %900 = vmatmul.mubr.f32.gmra.mrb[0].mxu0 %v829
        %v901 = vpop.f32.mrb[0].mxu0
        %v902 = vadd.f32 0.0, %v901
        %v903 = vpop.f32.mrb[0].mxu0
        %904 = vdwg.mxu0
        %v906 = vsel %vm827, %v658, 0
        %908 = vmatprep.subr.mxu0 0.0
        %909 = vmatpush1.msra.mxu0 %v833
        %910 = vmatprep.subr.mxu0 0.0
        %911 = vmatpush1.msra.mxu0 0.0
        %912 = vmatprep.subr.mxu0 0.0
        %913 = vmatpush1.msra.mxu0 0.0
        %914 = vmatprep.subr.mxu0 0.0
        %915 = vmatpush1.msra.mxu0 0.0
        %916 = vmatprep.subr.mxu0 0.0
        %917 = vmatpush1.msra.mxu0 0.0
        %918 = vmatprep.subr.mxu0 0.0
        %919 = vmatpush1.msra.mxu0 0.0
        %920 = vmatprep.subr.mxu0 0.0
        %921 = vmatpush1.msra.mxu0 0.0
        %922 = vmatprep.subr.mxu0 0.0
        %923 = vmatpush1.msra.mxu0 0.0
        %924 = vmatprep.subr.mxu0 0.0
        %925 = vmatpush1.msra.mxu0 0.0
        %926 = vmatprep.subr.mxu0 0.0
        %927 = vmatpush1.msra.mxu0 0.0
        %928 = vmatprep.subr.mxu0 0.0
        %929 = vmatpush1.msra.mxu0 0.0
        %930 = vmatprep.subr.mxu0 0.0
        %931 = vmatpush1.msra.mxu0 0.0
        %932 = vmatprep.subr.mxu0 0.0
        %933 = vmatpush1.msra.mxu0 0.0
        %934 = vmatprep.subr.mxu0 0.0
        %935 = vmatpush1.msra.mxu0 0.0
        %936 = vmatprep.subr.mxu0 0.0
        %937 = vmatpush1.msra.mxu0 0.0
        %938 = vmatprep.subr.mxu0 0.0
        %939 = vmatpush1.msra.mxu0 0.0
        %940 = vmatprep.subr.mxu0 0.0
        %941 = vmatpush1.msra.mxu0 0.0
        %942 = vmatprep.subr.mxu0 0.0
        %943 = vmatpush1.msra.mxu0 0.0
        %944 = vmatprep.subr.mxu0 0.0
        %945 = vmatpush1.msra.mxu0 0.0
        %946 = vmatprep.subr.mxu0 0.0
        %947 = vmatpush1.msra.mxu0 0.0
        %948 = vmatprep.subr.mxu0 0.0
        %949 = vmatpush1.msra.mxu0 0.0
        %950 = vmatprep.subr.mxu0 0.0
        %951 = vmatpush1.msra.mxu0 0.0
        %952 = vmatprep.subr.mxu0 0.0
        %953 = vmatpush1.msra.mxu0 0.0
        %954 = vmatprep.subr.mxu0 0.0
        %955 = vmatpush1.msra.mxu0 0.0
        %956 = vmatprep.subr.mxu0 0.0
        %957 = vmatpush1.msra.mxu0 0.0
        %958 = vmatprep.subr.mxu0 0.0
        %959 = vmatpush1.msra.mxu0 0.0
        %960 = vmatprep.subr.mxu0 0.0
        %961 = vmatpush1.msra.mxu0 0.0
        %962 = vmatprep.subr.mxu0 0.0
        %963 = vmatpush1.msra.mxu0 0.0
        %964 = vmatprep.subr.mxu0 0.0
        %965 = vmatpush1.msra.mxu0 0.0
        %966 = vmatprep.subr.mxu0 0.0
        %967 = vmatpush1.msra.mxu0 0.0
        %968 = vmatprep.subr.mxu0 0.0
        %969 = vmatpush1.msra.mxu0 0.0
        %970 = vmatprep.subr.mxu0 0.0
        %971 = vmatpush1.msra.mxu0 0.0
        %972 = vmatprep.mubr.f32.mxu0 0.0
        %973 = vmatmul.mubr.f32.gmra.mrb[0].mxu0 %v906
        %v974 = vpop.f32.mrb[0].mxu0
        %v975 = vadd.f32 %v902, %v974
        %v976 = vpop.f32.mrb[0].mxu0
        %977 = vdwg.mxu0
        %v978 = vxor.u32 %v975, 2147483648
        %v979 = vmul.f32 %v978, 1.442695
        %v980 = vpow.pop %v979
        %v981 = vadd.f32 %v980, 1.0
        %v982 = vrcp.pop %v981
        %v983 = vmul.f32 1.0, %v982
        %vm984 = vcmask 517120
        %985 = vst.msk [vmem:[%s189] sm:$0x3] %vm984, %v983
        %s986 = sand.u32 %s96, 1
        %s987 = scalar_lea.sflag [#allocation4], %s986
        %s988 = sand.u32 %s96, 1
        %s989 = smul.addr %s988, 2
        %s990 = scalar_lea.vmem [#allocation5], %s989
        // Predicated region
        $region37: #{tpu_custom_call.1} parent=31 // pred_check
          %p991 = pneg %p106
        $region38: #{tpu_custom_call.1} parent=31 // pred_check_branch
          %993 = sbr.rel (%p991) target = $region40
        $region39: #{tpu_custom_call.1} parent=31 // pred_region
          %s995 = ssub.s32 32, 32
          %996 = vsyncadd %s987, %s995
          %s997 = smul.addr %s20, 32
          %s998 = scalar_lea.hbm %s3, %s997
          %s1000 = sshll.u32 %s990, 4
          %s1001 = int_to_ptr.vmem [resolvable:$true] %s1000
          %1003 = dma.vmem_to_hbm [thread:$0]  %s1001, 32, %s998, %s987
        $region40: #{tpu_custom_call.1} parent=31 // pred_fallthru
          _
      $region32: #{tpu_custom_call.1} parent=5 // pred_fallthru
        _
      %p1004 = scmp.le.s32.totalorder 2, %s15
      // Predicated region
      $region41: #{tpu_custom_call.1} parent=5 // pred_check
        %p1005 = pneg %p1004
      $region42: #{tpu_custom_call.1} parent=5 // pred_check_branch
        %1007 = sbr.rel (%p1005) target = $region44
      $region43: #{tpu_custom_call.1} parent=5 // pred_region
        %s1008 = ssub.s32 %s15, 2
        // Predicated region
        $region45: #{tpu_custom_call.1} parent=43 // pred_check
          %p1009 = pneg %p112
        $region46: #{tpu_custom_call.1} parent=43 // pred_check_branch
          %1011 = sbr.rel (%p1009) target = $region48
        $region47: #{tpu_custom_call.1} parent=43 // pred_region
          %s1012 = sand.u32 %s97, 1
          %s1013 = scalar_lea.sflag [#allocation4], %s1012
          %s1014 = sand.u32 %s97, 1
          %s1015 = smul.addr %s1014, 2
          %s1016 = scalar_lea.vmem [#allocation5], %s1015
          %1017 = dma.done %s1013, 32
        $region48: #{tpu_custom_call.1} parent=43 // pred_fallthru
          _
      $region44: #{tpu_custom_call.1} parent=5 // pred_fallthru
        _
    $region6: #{tpu_custom_call.1} parent=1 // loop_footer
      %s19 = sadd.s32 1, %s15
    $region7: #{tpu_custom_call.1} parent=1 // loop_footer_branch
      %14 = sbr.rel target = $region3
    $region8: #{tpu_custom_call.1} parent=1 // loop_exit
      _
    %1018 = vsyncpa [#allocation3], 1
    %s1019 = scalar_lea.sflag [#allocation3], 1
    %1020 = vsyncpa %s1019, 1
    %1021 = vsyncpa [#allocation4], 1
    %s1022 = scalar_lea.sflag [#allocation4], 1
    %1023 = vsyncpa %s1022, 1

</llo_original>
